<compile_context>
chip_gen: v7x
topology: tpu7x:2x2x1
jax: 0.10.0
libtpu: 0.0.40
codegen_flags: <defaults>
</compile_context>

<pallas_src>
import functools

import jax
import jax.numpy as jnp
from jax.experimental import pallas as pl
from jax.experimental.pallas import tpu as pltpu


_LANE = 128
_MAX_MIX_LANES = 1024   # C*H*W ceiling for the small-spatial (MXU) path: mix <= ~4 MiB f32


def _round_up(x: int, m: int) -> int:
    return (x + m - 1) // m * m


def _sublane_multiple(dtype) -> int:
    # Physical sublane tile: 8 for 4-byte, 16 for 2-byte, 32 for 1-byte dtypes.
    return max(8, 32 // jnp.dtype(dtype).itemsize)


def _gen_params():
    """Returns (target_block_bytes, vmem_limit_bytes), TPU-generation aware.

    v7x: 3.2 TB/s HBM but only 64 MiB VMEM -> ~4 MiB blocks amortize the ~0.35 us
    per-grid-step overhead while 2x(in+out) double buffers + f32 temporaries (2x for
    bf16 inputs) stay under a 48 MiB scoped limit.  v5e/v6e: 2 MiB blocks already put
    per-step overhead <10%; 32 MiB lifts v5e's 16 MiB scoped default.
    """
    try:
        kind = jax.devices()[0].device_kind.lower()
    except Exception:
        kind = ""
    if "v7" in kind or "7x" in kind:
        return 4 * 1024 * 1024, 48 * 1024 * 1024
    return 2 * 1024 * 1024, 32 * 1024 * 1024


# ---------------------------------------------------------------------------
# Path 1: H*W >= 128 (lane-dense channels-first layout [N, C, HW])
# ---------------------------------------------------------------------------

def _ln_sublane_kernel(x_ref, gamma_ref, beta_ref, o_ref, *, eps: float, inv_c: float):
    # x_ref: (tile_n, C, tile_hw) -- reduce over C (sublane axis), H*W on lanes.
    # NOTE: with the cdiv grid, boundary blocks carry stale data in out-of-range lanes
    # and n-rows.  That is benign because every lane and every n-slab is independent
    # (the only reduction is over the un-tiled C axis) and Pallas writes back only the
    # valid region.  Keep future edits free of cross-lane / cross-row ops.
    x = x_ref[...].astype(jnp.float32)
    mu = jnp.sum(x, axis=1, keepdims=True) * inv_c              # (tile_n, 1, tile_hw)
    xc = x - mu
    var = jnp.sum(xc * xc, axis=1, keepdims=True) * inv_c       # biased, like torch LN
    inv = jax.lax.rsqrt(var + eps)                              # EUP rsqrt (free slot)
    g = gamma_ref[...].astype(jnp.float32)[None, :, :]          # (1, C, 1)
    b = beta_ref[...].astype(jnp.float32)[None, :, :]
    o_ref[...] = (xc * inv * g + b).astype(o_ref.dtype)


def _pick_tiles_sublane(n: int, c: int, hw: int, dtype, target: int):
    """Choose (tile_n, tile_hw) so each PHYSICAL block is ~target bytes, lane-dense."""
    itemsize = jnp.dtype(dtype).itemsize
    pc = _round_up(c, _sublane_multiple(dtype))          # sublane-padded C (as stored)
    row_bytes = pc * _round_up(hw, _LANE) * itemsize     # one n-slab in VMEM
    if row_bytes <= target:
        tile_hw = hw                                     # full last dim (always legal)
    else:
        fit = (target // (pc * itemsize)) // _LANE * _LANE
        tile_hw = max(_LANE, fit)
        # Prefer >=512-lane (>=2 KiB) contiguous HBM runs when that stays within ~2x target.
        if tile_hw < 512 and pc * 512 * itemsize <= 2 * target:
            tile_hw = 512
        tile_hw = min(tile_hw, hw)
    slab = pc * _round_up(tile_hw, _LANE) * itemsize
    tile_n = max(1, min(n, target // max(1, slab)))
    # Keep >= 2 similarly sized grid steps so v7x's two TensorCores both get work.
    if pl.cdiv(n, tile_n) * pl.cdiv(hw, tile_hw) < 2:
        if hw >= 2 * _LANE:
            tile_hw = _round_up(pl.cdiv(hw, 2), _LANE)   # near-equal lane-aligned halves
        elif n > 1:
            tile_n = pl.cdiv(n, 2)                       # near-equal halves of n
    return tile_n, tile_hw


def _layernorm_sublane(x3d: jax.Array, gamma: jax.Array, beta: jax.Array, eps: float):
    n, c, hw = x3d.shape
    target, vmem_limit = _gen_params()
    tile_n, tile_hw = _pick_tiles_sublane(n, c, hw, x3d.dtype, target)
    grid = (pl.cdiv(n, tile_n), pl.cdiv(hw, tile_hw))

    gamma2d = gamma.reshape(c, 1).astype(jnp.float32)
    beta2d = beta.reshape(c, 1).astype(jnp.float32)

    kernel = functools.partial(_ln_sublane_kernel, eps=float(eps), inv_c=1.0 / c)
    return pl.pallas_call(
        kernel,
        out_shape=jax.ShapeDtypeStruct((n, c, hw), x3d.dtype),
        grid=grid,
        in_specs=[
            pl.BlockSpec((tile_n, c, tile_hw), lambda i, j: (i, 0, j)),
            pl.BlockSpec((c, 1), lambda i, j: (0, 0)),
            pl.BlockSpec((c, 1), lambda i, j: (0, 0)),
        ],
        out_specs=pl.BlockSpec((tile_n, c, tile_hw), lambda i, j: (i, 0, j)),
        compiler_params=pltpu.CompilerParams(
            dimension_semantics=("parallel", "parallel"),
            vmem_limit_bytes=vmem_limit,
        ),
    )(x3d, gamma2d, beta2d)


# ---------------------------------------------------------------------------
# Path 2: H*W < 128 (lane-dense [N, C*HW] layout; channel reduce via one MXU pass)
# ---------------------------------------------------------------------------

def _ln_lane_kernel(x_ref, mix_ref, gamma_ref, beta_ref, o_ref, *, eps: float, inv_c: float):
    # x_ref: (tile_n, C*HW) with C*HW on the lane axis (lane-dense loads AND stores).
    # mix_ref: (C*HW, C*HW) 0/1 matrix; x @ mix performs the over-channels segment sum
    # and broadcasts it back to every (c, s) lane position in a single MXU pass.
    x = x_ref[...].astype(jnp.float32)
    mix = mix_ref[...]
    mu = jnp.dot(x, mix, preferred_element_type=jnp.float32) * inv_c
    ex2 = jnp.dot(x * x, mix, preferred_element_type=jnp.float32) * inv_c
    # One-pass variance E[x^2] - mu^2 (shares the MXU pass and drops the block-sized
    # centered temporary).  Fine in f32 for conv/spike activations; only very-large-mean
    # inputs would need the two-pass form.
    var = jnp.maximum(ex2 - mu * mu, 0.0)
    inv = jax.lax.rsqrt(var + eps)
    g = gamma_ref[...].astype(jnp.float32)       # (1, C*HW), pre-broadcast per channel
    b = beta_ref[...].astype(jnp.float32)
    o_ref[...] = ((x - mu) * inv * g + b).astype(o_ref.dtype)


def _layernorm_lane(x2d: jax.Array, gamma: jax.Array, beta: jax.Array,
                    c: int, hw: int, eps: float):
    n, chw = x2d.shape
    _, vmem_limit = _gen_params()
    target = 2 * 1024 * 1024      # keep modest: the mix matrix also lives in VMEM
    itemsize = jnp.dtype(x2d.dtype).itemsize
    sub = _sublane_multiple(x2d.dtype)
    row_bytes = _round_up(chw, _LANE) * itemsize
    tile_n = max(sub, (target // row_bytes) // sub * sub)
    tile_n = min(tile_n, n)
    if tile_n == n and n >= 2 * sub:
        # Balanced even-ish split for v7x's two TensorCores, kept sublane-aligned.
        tile_n = _round_up(pl.cdiv(n, 2), sub)
    grid = (pl.cdiv(n, tile_n),)

    idx = jnp.arange(chw, dtype=jnp.int32)
    mix = (idx[:, None] % hw == idx[None, :] % hw).astype(jnp.float32)   # (CHW, CHW)
    gamma_full = jnp.repeat(gamma.astype(jnp.float32), hw).reshape(1, chw)
    beta_full = jnp.repeat(beta.astype(jnp.float32), hw).reshape(1, chw)

    kernel = functools.partial(_ln_lane_kernel, eps=float(eps), inv_c=1.0 / c)
    return pl.pallas_call(
        kernel,
        out_shape=jax.ShapeDtypeStruct((n, chw), x2d.dtype),
        grid=grid,
        in_specs=[
            pl.BlockSpec((tile_n, chw), lambda i: (i, 0)),
            pl.BlockSpec((chw, chw), lambda i: (0, 0)),
            pl.BlockSpec((1, chw), lambda i: (0, 0)),
            pl.BlockSpec((1, chw), lambda i: (0, 0)),
        ],
        out_specs=pl.BlockSpec((tile_n, chw), lambda i: (i, 0)),
        compiler_params=pltpu.CompilerParams(
            dimension_semantics=("parallel",),
            vmem_limit_bytes=vmem_limit,
        ),
    )(x2d, mix, gamma_full, beta_full)


# ---------------------------------------------------------------------------
# Public entry point (forward of the SNN LayerNorm module)
# ---------------------------------------------------------------------------

def snn_layernorm(x: jax.Array, gamma: jax.Array, beta: jax.Array,
                  eps: float = 1e-5) -> jax.Array:
    """Forward of the SNN LayerNorm: per (t,b,h,w) normalize over C, affine [C].

    Mathematically identical to permute([0,1,3,4,2]) -> nn.LayerNorm(C) -> permute back,
    but implemented without any HBM transposes (contiguous reshapes + in-kernel C
    reduction).  Accepts f32 or bf16 x (stats always computed in f32, dtype preserved).
    """
    t, b, c, h, w = x.shape
    n, hw = t * b, h * w
    if hw >= _LANE or _round_up(c * hw, _LANE) > _MAX_MIX_LANES:
        # Channels-first layout [N, C, HW]: C on sublanes (reduced), HW lane-dense.
        # TODO(synk): huge-C tiny-HW shapes land here too and pay <128-lane masked stores.
        y = _layernorm_sublane(x.reshape(n, c, hw), gamma, beta, eps)
    else:
        # Small feature maps (HW < 128): keep the lane axis dense with C*HW and do the
        # channel reduction with one MXU pass against a small 0/1 mixing matrix.
        y = _layernorm_lane(x.reshape(n, c * hw), gamma, beta, c, hw, eps)
    return y.reshape(t, b, c, h, w)


def _reference(x, gamma, beta, eps=1e-5):
    xf = x.astype(jnp.float32)
    mu = jnp.mean(xf, axis=2, keepdims=True)
    var = jnp.mean((xf - mu) ** 2, axis=2, keepdims=True)
    y = (xf - mu) * jax.lax.rsqrt(var + eps)
    y = y * gamma[None, None, :, None, None] + beta[None, None, :, None, None]
    return y.astype(x.dtype)


if __name__ == "__main__":
    key = jax.random.PRNGKey(0)
    kx, kg, kb, kx2 = jax.random.split(key, 4)

    T, B, C, H, W = 2, 2, 4, 16, 16
    x = jax.random.normal(kx, (T, B, C, H, W), dtype=jnp.float32)
    # nn.LayerNorm defaults are ones/zeros; perturb so the affine path is exercised.
    gamma = 1.0 + 0.1 * jax.random.normal(kg, (C,), dtype=jnp.float32)
    beta = 0.1 * jax.random.normal(kb, (C,), dtype=jnp.float32)

    out = jax.block_until_ready(snn_layernorm(x, gamma, beta, eps=1e-5))
    ref = _reference(x, gamma, beta, eps=1e-5)
    assert out.shape == x.shape
    assert jnp.max(jnp.abs(out - ref)) < 1e-4, "sublane-path mismatch vs reference"

    # Small-spatial case (H*W < 128) exercises the lane-dense MXU segment-reduce path.
    Hs = Ws = 8
    xs = jax.random.normal(kx2, (T, B, C, Hs, Ws), dtype=jnp.float32)
    outs = jax.block_until_ready(snn_layernorm(xs, gamma, beta, eps=1e-5))
    refs = _reference(xs, gamma, beta, eps=1e-5)
    assert outs.shape == xs.shape
    assert jnp.max(jnp.abs(outs - refs)) < 1e-4, "lane-path mismatch vs reference"

    print("KERNEL_OK")
</pallas_src>

<mosaic_0001>
module attributes {stable_mosaic.version = 11 : i64} {
  func.func @_ln_sublane_kernel(%arg0: i32, %arg1: i32, %arg2: memref<4x4x128xf32, #tpu.memory_space<vmem>>, %arg3: memref<4x1xf32, #tpu.memory_space<vmem>>, %arg4: memref<4x1xf32, #tpu.memory_space<vmem>>, %arg5: memref<4x4x128xf32, #tpu.memory_space<vmem>>) attributes {dimension_semantics = [#tpu.dimension_semantics<parallel>, #tpu.dimension_semantics<parallel>], iteration_bounds = array<i64: 1, 2>, scalar_prefetch = 0 : i64, scratch_operands = 0 : i64, tpu.core_type = #tpu.core_type<tc>, window_params = [{transform_indices = @transform_0, window_bounds = array<i64: 4, 4, 128>}, {pipeline_mode = #tpu.pipeline_mode<synchronous>, transform_indices = @transform_1, window_bounds = array<i64: 4, 1>}, {pipeline_mode = #tpu.pipeline_mode<synchronous>, transform_indices = @transform_2, window_bounds = array<i64: 4, 1>}, {transform_indices = @transform_3, window_bounds = array<i64: 4, 4, 128>}]} {
    %c0 = arith.constant 0 : index
    %c0_0 = arith.constant 0 : index
    %c0_1 = arith.constant 0 : index
    %0 = vector.load %arg2[%c0, %c0_0, %c0_1] : memref<4x4x128xf32, #tpu.memory_space<vmem>>, vector<4x4x128xf32>
    %cst = arith.constant dense<0.000000e+00> : vector<4x128xf32>
    %1 = vector.multi_reduction <add>, %0, %cst [1] : vector<4x4x128xf32> to vector<4x128xf32>
    %2 = vector.shape_cast %1 : vector<4x128xf32> to vector<4x1x128xf32>
    %cst_2 = arith.constant 2.500000e-01 : f32
    %3 = vector.broadcast %cst_2 : f32 to vector<4x1x128xf32>
    %4 = arith.mulf %2, %3 : vector<4x1x128xf32>
    %5 = vector.broadcast %4 : vector<4x1x128xf32> to vector<4x4x128xf32>
    %6 = arith.subf %0, %5 : vector<4x4x128xf32>
    %7 = arith.mulf %6, %6 : vector<4x4x128xf32>
    %cst_3 = arith.constant dense<0.000000e+00> : vector<4x128xf32>
    %8 = vector.multi_reduction <add>, %7, %cst_3 [1] : vector<4x4x128xf32> to vector<4x128xf32>
    %9 = vector.shape_cast %8 : vector<4x128xf32> to vector<4x1x128xf32>
    %cst_4 = arith.constant 2.500000e-01 : f32
    %10 = vector.broadcast %cst_4 : f32 to vector<4x1x128xf32>
    %11 = arith.mulf %9, %10 : vector<4x1x128xf32>
    %cst_5 = arith.constant 9.99999974E-6 : f32
    %12 = vector.broadcast %cst_5 : f32 to vector<4x1x128xf32>
    %13 = arith.addf %11, %12 : vector<4x1x128xf32>
    %14 = math.rsqrt %13 : vector<4x1x128xf32>
    %c0_6 = arith.constant 0 : index
    %c0_7 = arith.constant 0 : index
    %15 = vector.load %arg3[%c0_6, %c0_7] : memref<4x1xf32, #tpu.memory_space<vmem>>, vector<4x1xf32>
    %16 = vector.shape_cast %15 : vector<4x1xf32> to vector<1x4x1xf32>
    %c0_8 = arith.constant 0 : index
    %c0_9 = arith.constant 0 : index
    %17 = vector.load %arg4[%c0_8, %c0_9] : memref<4x1xf32, #tpu.memory_space<vmem>>, vector<4x1xf32>
    %18 = vector.shape_cast %17 : vector<4x1xf32> to vector<1x4x1xf32>
    %19 = vector.broadcast %14 : vector<4x1x128xf32> to vector<4x4x128xf32>
    %20 = arith.mulf %6, %19 : vector<4x4x128xf32>
    %21 = vector.broadcast %16 : vector<1x4x1xf32> to vector<4x4x128xf32>
    %22 = arith.mulf %20, %21 : vector<4x4x128xf32>
    %23 = vector.broadcast %18 : vector<1x4x1xf32> to vector<4x4x128xf32>
    %24 = arith.addf %22, %23 : vector<4x4x128xf32>
    %c0_10 = arith.constant 0 : index
    %c0_11 = arith.constant 0 : index
    %c0_12 = arith.constant 0 : index
    %25 = vector.load %arg5[%c0_10, %c0_11, %c0_12] : memref<4x4x128xf32, #tpu.memory_space<vmem>>, vector<4x4x128xf32>
    tpu.vector_store %arg5[%c0_10, %c0_11, %c0_12], %24 {strides = array<i32>} : memref<4x4x128xf32, #tpu.memory_space<vmem>>, vector<4x4x128xf32>,
    return
  }
  func.func @transform_0(%arg0: i32, %arg1: i32) -> (i32, i32, i32) {
    %c0_i32 = arith.constant 0 : i32
    %c0_i32_0 = arith.constant 0 : i32
    return %arg0, %c0_i32, %arg1 : i32, i32, i32
  }
  func.func @transform_1(%arg0: i32, %arg1: i32) -> (i32, i32) {
    %c0_i32 = arith.constant 0 : i32
    %c0_i32_0 = arith.constant 0 : i32
    %c0_i32_1 = arith.constant 0 : i32
    return %c0_i32, %c0_i32_0 : i32, i32
  }
  func.func @transform_2(%arg0: i32, %arg1: i32) -> (i32, i32) {
    %c0_i32 = arith.constant 0 : i32
    %c0_i32_0 = arith.constant 0 : i32
    %c0_i32_1 = arith.constant 0 : i32
    return %c0_i32, %c0_i32_0 : i32, i32
  }
  func.func @transform_3(%arg0: i32, %arg1: i32) -> (i32, i32, i32) {
    %c0_i32 = arith.constant 0 : i32
    %c0_i32_0 = arith.constant 0 : i32
    return %arg0, %c0_i32, %arg1 : i32, i32, i32
  }
}

</mosaic_0001>

<llo_original>
// kernel: tpu_custom_call.1
$region0: #{tpu_custom_call.1}
  #allocation0 [shape = 'u32[]', space=smem, size = 0x4, offset = 0x4, fixed_abs, tag = 'smem constant byte address 0x4 - core index']
  #allocation1 [shape = 'u32[144,128]{1,0:T(1,128)}', space=vmem, size = 0x12000, scoped, tag = 'internal scratch']
  %s0 = inlined_call_operand.hbm [shape: f32[4,4,256], index: 0, kind: input, shape index: {}]
  %s1 = inlined_call_operand.vmem [shape: f32[4,1], index: 1, kind: input, shape index: {}]
  %s2 = inlined_call_operand.vmem [shape: f32[4,1], index: 2, kind: input, shape index: {}]
  %s3 = inlined_call_operand.hbm [shape: f32[4,4,256], index: 3, kind: output, shape index: {}]
  %s4 = sld [smem:[#allocation0]]
  $region49: #{tpu_custom_call.1} parent=0
    _
  %s6 = ssub.s32 1, %s4
  %s7 = scalar_select 0, %s6, %s4
  $region1: #{tpu_custom_call.1} parent=0
    #allocation2 [shape = 'u8[16384]{0}', space=vmem, size = 0x4000, scoped, tag = 'input window, operand 0']
    #allocation3 [shape = 's32[2]{0}', space=sflag, size = 0x8, scoped, tag = 'scoped memory for tpu_custom_call.1']
    #allocation4 [shape = 's32[2]{0}', space=sflag, size = 0x8, scoped, tag = 'scoped memory for tpu_custom_call.1']
    #allocation5 [shape = 'u8[16384]{0}', space=vmem, size = 0x4000, scoped, tag = 'output window, operand 0']
    %8 = vsyncpa [#allocation3], 0
    %s9 = scalar_lea.sflag [#allocation3], 1
    %10 = vsyncpa %s9, 0
    %11 = vsyncpa [#allocation4], 0
    %s12 = scalar_lea.sflag [#allocation4], 1
    %13 = vsyncpa %s12, 0
    loop: start=0, step=1, limit=4
    $region2: #{tpu_custom_call.1} parent=1 // loop_pre_header
      _
    $region3: #{tpu_custom_call.1} parent=1 // loop_header
      %s15 = sphi 0, %s19
      %p16 = scmp.ge.s32.totalorder %s15, 4
      %s22 = sphi 0, %s34
      %s23 = sphi 0, %s30
      %s24 = sphi 0, %s22
      %s25 = sphi 0, %s23
      %s26 = sphi 0, %s24
      %s27 = sphi 0, %s25
      %s39 = sphi 0, %s41
      %s42 = sphi 0, %s39
      %s43 = sphi 0, %s42
      %s59 = sphi 0, %s43
      %s63 = sphi 0, %s63
      %s65 = sphi 0, %s63
      %s66 = sphi 0, %s65
      %s80 = sphi 0, %s66
      %s84 = sphi 0, %s84
      %s86 = sphi 0, %s84
      %s87 = sphi 0, %s86
      %s101 = sphi 0, %s87
      %s109 = sphi 0, %s111
      %s112 = sphi 0, %s109
      %s113 = sphi 0, %s112
      %s129 = sphi 0, %s113
    $region4: #{tpu_custom_call.1} parent=1 // loop_header_branch
      %18 = sbr.rel (%p16) target = $region8
    $region5: #{tpu_custom_call.1} parent=1 // loop_body
      %s20 = ssub.s32 %s15, 1
      %s21 = ssub.s32 %s15, 2
      %s28 = sadd.s32 1, %s23
      %p29 = scmp.ge.s32.totalorder %s28, 2
      %s30 = scalar_select %p29, 0, %s28
      %s31 = sadd.s32 1, %s22
      %s32 = scalar_select %p29, %s31, %s22
      %p33 = scmp.ge.s32.totalorder %s32, 1
      %s34 = scalar_select %p33, 0, %s32
      %s35 = ssub.s32 %s22, %s34
      %s36 = ssub.s32 %s23, %s30
      %s37 = sor.u32 %s35, %s36
      %p38 = scmp.eq.s32.totalorder %s37, 0
      %s40 = sadd.s32 %s39, 1
      %s41 = scalar_select %p38, %s39, %s40
      %p44 = pneg %p38
      %p45 = scmp.eq.s32.totalorder %s15, 1
      %p46 = por %p44, %p45
      %p47 = scmp.ne.s32.totalorder %s39, %s42
      %p48 = scmp.eq.s32.totalorder %s15, 0
      %p49 = por %p47, %p48
      %p50 = scmp.ne.s32.totalorder %s39, %s42
      %p51 = scmp.eq.s32.totalorder %s20, 1
      %p52 = por %p50, %p51
      %p53 = scmp.ne.s32.totalorder %s42, %s43
      %p54 = scmp.eq.s32.totalorder %s20, 0
      %p55 = por %p53, %p54
      %p56 = scmp.ne.s32.totalorder %s42, %s43
      %p57 = scmp.eq.s32.totalorder %s21, 1
      %p58 = por %p56, %p57
      %p60 = scmp.ne.s32.totalorder %s43, %s59
      %p61 = scmp.eq.s32.totalorder %s21, 0
      %p62 = por %p60, %p61
      %s64 = sadd.s32 %s63, 1
      %p67 = scmp.eq.s32.totalorder %s15, 1
      %p68 = scmp.ne.s32.totalorder %s63, %s65
      %p69 = scmp.eq.s32.totalorder %s15, 0
      %p70 = por %p68, %p69
      %p71 = scmp.ne.s32.totalorder %s63, %s65
      %p72 = scmp.eq.s32.totalorder %s20, 1
      %p73 = por %p71, %p72
      %p74 = scmp.ne.s32.totalorder %s65, %s66
      %p75 = scmp.eq.s32.totalorder %s20, 0
      %p76 = por %p74, %p75
      %p77 = scmp.ne.s32.totalorder %s65, %s66
      %p78 = scmp.eq.s32.totalorder %s21, 1
      %p79 = por %p77, %p78
      %p81 = scmp.ne.s32.totalorder %s66, %s80
      %p82 = scmp.eq.s32.totalorder %s21, 0
      %p83 = por %p81, %p82
      %s85 = sadd.s32 %s84, 1
      %p88 = scmp.eq.s32.totalorder %s15, 1
      %p89 = scmp.ne.s32.totalorder %s84, %s86
      %p90 = scmp.eq.s32.totalorder %s15, 0
      %p91 = por %p89, %p90
      %p92 = scmp.ne.s32.totalorder %s84, %s86
      %p93 = scmp.eq.s32.totalorder %s20, 1
      %p94 = por %p92, %p93
      %p95 = scmp.ne.s32.totalorder %s86, %s87
      %p96 = scmp.eq.s32.totalorder %s20, 0
      %p97 = por %p95, %p96
      %p98 = scmp.ne.s32.totalorder %s86, %s87
      %p99 = scmp.eq.s32.totalorder %s21, 1
      %p100 = por %p98, %p99
      %p102 = scmp.ne.s32.totalorder %s87, %s101
      %p103 = scmp.eq.s32.totalorder %s21, 0
      %p104 = por %p102, %p103
      %s105 = ssub.s32 %s22, %s34
      %s106 = ssub.s32 %s23, %s30
      %s107 = sor.u32 %s105, %s106
      %p108 = scmp.eq.s32.totalorder %s107, 0
      %s110 = sadd.s32 %s109, 1
      %s111 = scalar_select %p108, %s109, %s110
      %p114 = pneg %p108
      %p115 = scmp.eq.s32.totalorder %s15, 1
      %p116 = por %p114, %p115
      %p117 = scmp.ne.s32.totalorder %s109, %s112
      %p118 = scmp.eq.s32.totalorder %s15, 0
      %p119 = por %p117, %p118
      %p120 = scmp.ne.s32.totalorder %s109, %s112
      %p121 = scmp.eq.s32.totalorder %s20, 1
      %p122 = por %p120, %p121
      %p123 = scmp.ne.s32.totalorder %s112, %s113
      %p124 = scmp.eq.s32.totalorder %s20, 0
      %p125 = por %p123, %p124
      %p126 = scmp.ne.s32.totalorder %s112, %s113
      %p127 = scmp.eq.s32.totalorder %s21, 1
      %p128 = por %p126, %p127
      %p130 = scmp.ne.s32.totalorder %s113, %s129
      %p131 = scmp.eq.s32.totalorder %s21, 0
      %p132 = por %p130, %p131
      %p133 = scmp.le.s32.totalorder 1, %s15
      %p134 = scmp.lt.s32.totalorder %s15, 3
      %p135 = pnand %p133, %p134
      %p136 = pneg %p135
      // Predicated region
      $region9: #{tpu_custom_call.1} parent=5 // pred_check
        _
      $region10: #{tpu_custom_call.1} parent=5 // pred_check_branch
        %138 = sbr.rel (%p135) target = $region12
      $region11: #{tpu_custom_call.1} parent=5 // pred_region
        %s139 = ssub.s32 %s15, 1
        // Predicated region
        $region13: #{tpu_custom_call.1} parent=11 // pred_check
          %p140 = pneg %p76
        $region14: #{tpu_custom_call.1} parent=11 // pred_check_branch
          %142 = sbr.rel (%p140) target = $region16
        $region15: #{tpu_custom_call.1} parent=11 // pred_region
          _
        $region16: #{tpu_custom_call.1} parent=11 // pred_fallthru
          _
        // Predicated region
        $region17: #{tpu_custom_call.1} parent=11 // pred_check
          %p143 = pneg %p97
        $region18: #{tpu_custom_call.1} parent=11 // pred_check_branch
          %145 = sbr.rel (%p143) target = $region20
        $region19: #{tpu_custom_call.1} parent=11 // pred_region
          _
        $region20: #{tpu_custom_call.1} parent=11 // pred_fallthru
          _
      $region12: #{tpu_custom_call.1} parent=5 // pred_fallthru
        _
      %p146 = scmp.lt.s32.totalorder %s15, 2
      // Predicated region
      $region21: #{tpu_custom_call.1} parent=5 // pred_check
        %p147 = pneg %p146
      $region22: #{tpu_custom_call.1} parent=5 // pred_check_branch
        %149 = sbr.rel (%p147) target = $region24
      $region23: #{tpu_custom_call.1} parent=5 // pred_region
        // Predicated region
        $region25: #{tpu_custom_call.1} parent=23 // pred_check
          %p150 = pneg %p49
        $region26: #{tpu_custom_call.1} parent=23 // pred_check_branch
          %152 = sbr.rel (%p150) target = $region28
        $region27: #{tpu_custom_call.1} parent=23 // pred_region
          %s153 = sand.u32 %s39, 1
          %s154 = scalar_lea.sflag [#allocation3], %s153
          %s155 = sand.u32 %s39, 1
          %s156 = smul.addr %s155, 16
          %s157 = scalar_lea.vmem [#allocation2], %s156
          %s158 = smul.u32 4, %s22
          %s160 = ssub.s32 256, 256
          %161 = vsyncadd %s154, %s160
          %s162 = smul.addr %s158, 2
          %s163 = sadd.s32 %s23, %s162
          %s164 = smul.addr %s163, 64
          %s165 = scalar_lea.hbm %s0, %s164
          %s166 = sshll.u32 %s157, 4
          %s167 = int_to_ptr.vmem [resolvable:$true] %s166
          %172 = dma.hbm_to_vmem [thread:$0]  %s165, 256, %s167, %s154, 128, 64, 4
        $region28: #{tpu_custom_call.1} parent=23 // pred_fallthru
          _
      $region24: #{tpu_custom_call.1} parent=5 // pred_fallthru
        _
      %p173 = scmp.le.s32.totalorder 1, %s15
      %p174 = scmp.lt.s32.totalorder %s15, 3
      %p175 = pnand %p173, %p174
      %p176 = pneg %p175
      // Predicated region
      $region29: #{tpu_custom_call.1} parent=5 // pred_check
        _
      $region30: #{tpu_custom_call.1} parent=5 // pred_check_branch
        %178 = sbr.rel (%p175) target = $region32
      $region31: #{tpu_custom_call.1} parent=5 // pred_region
        %s179 = ssub.s32 %s15, 1
        %s180 = sand.u32 %s42, 1
        %s181 = scalar_lea.sflag [#allocation3], %s180
        %s182 = sand.u32 %s42, 1
        %s183 = smul.addr %s182, 16
        %s184 = scalar_lea.vmem [#allocation2], %s183
        // Predicated region
        $region33: #{tpu_custom_call.1} parent=31 // pred_check
          %p185 = pneg %p55
        $region34: #{tpu_custom_call.1} parent=31 // pred_check_branch
          %187 = sbr.rel (%p185) target = $region36
        $region35: #{tpu_custom_call.1} parent=31 // pred_region
          %188 = dma.done %s181, 256
        $region36: #{tpu_custom_call.1} parent=31 // pred_fallthru
          _
        %s189 = sand.u32 %s42, 1
        %s190 = scalar_lea.sflag [#allocation3], %s189
        %s191 = sand.u32 %s42, 1
        %s192 = smul.addr %s191, 16
        %s193 = scalar_lea.vmem [#allocation2], %s192
        %p194 = pneg %p55
        %p195 = pneg %p52
        %p196 = pneg %p76
        %p197 = pneg %p73
        %p198 = pneg %p97
        %p199 = pneg %p94
        %p200 = pneg %p125
        %p201 = pneg %p122
        %s202 = sand.u32 %s112, 1
        %s203 = scalar_lea.sflag [#allocation4], %s202
        %s204 = sand.u32 %s112, 1
        %s205 = smul.addr %s204, 16
        %s206 = scalar_lea.vmem [#allocation5], %s205
        %s207 = smul.u32 4, %s24
        %s208 = smul.u32 4, %s24
        %v209 = vld [vmem:[%s184] sm:$0xf]
        %v210 = vld [vmem:[%s184 + $0x4] sm:$0xf]
        %v211 = vld [vmem:[%s184 + $0x8] sm:$0xf]
        %v212 = vld [vmem:[%s184 + $0xc] sm:$0xf]
        %vm213 = vcmask 1043456
        %v214 = vsel %vm213, %v209, 0.0
        %v215 = vrot.slane %v214, 4
        %v216 = vadd.f32 %v214, %v215
        %v217 = vrot.slane %v216, 2
        %v218 = vadd.f32 %v216, %v217
        %v219 = vrot.slane %v218, 1
        %v220 = vadd.f32 %v218, %v219
        %v221 = vsel %vm213, %v210, 0.0
        %v222 = vrot.slane %v221, 4
        %v223 = vadd.f32 %v221, %v222
        %v224 = vrot.slane %v223, 2
        %v225 = vadd.f32 %v223, %v224
        %v226 = vrot.slane %v225, 1
        %v227 = vadd.f32 %v225, %v226
        %v228 = vsel %vm213, %v211, 0.0
        %v229 = vrot.slane %v228, 4
        %v230 = vadd.f32 %v228, %v229
        %v231 = vrot.slane %v230, 2
        %v232 = vadd.f32 %v230, %v231
        %v233 = vrot.slane %v232, 1
        %v234 = vadd.f32 %v232, %v233
        %v235 = vsel %vm213, %v212, 0.0
        %v236 = vrot.slane %v235, 4
        %v237 = vadd.f32 %v235, %v236
        %v238 = vrot.slane %v237, 2
        %v239 = vadd.f32 %v237, %v238
        %v240 = vrot.slane %v239, 1
        %v241 = vadd.f32 %v239, %v240
        %v242 = vmul.f32 %v220, 0.25
        %v243 = vmul.f32 %v227, 0.25
        %v244 = vmul.f32 %v234, 0.25
        %v245 = vmul.f32 %v241, 0.25
        %v246 = vsub.f32 %v209, %v242
        %v247 = vsub.f32 %v210, %v243
        %v248 = vsub.f32 %v211, %v244
        %v249 = vsub.f32 %v212, %v245
        %v250 = vmul.f32 %v246, %v246
        %v251 = vmul.f32 %v247, %v247
        %v252 = vmul.f32 %v248, %v248
        %v253 = vmul.f32 %v249, %v249
        %v254 = vsel %vm213, %v250, 0.0
        %v255 = vrot.slane %v254, 4
        %v256 = vadd.f32 %v254, %v255
        %v257 = vrot.slane %v256, 2
        %v258 = vadd.f32 %v256, %v257
        %v259 = vrot.slane %v258, 1
        %v260 = vadd.f32 %v258, %v259
        %v261 = vsel %vm213, %v251, 0.0
        %v262 = vrot.slane %v261, 4
        %v263 = vadd.f32 %v261, %v262
        %v264 = vrot.slane %v263, 2
        %v265 = vadd.f32 %v263, %v264
        %v266 = vrot.slane %v265, 1
        %v267 = vadd.f32 %v265, %v266
        %v268 = vsel %vm213, %v252, 0.0
        %v269 = vrot.slane %v268, 4
        %v270 = vadd.f32 %v268, %v269
        %v271 = vrot.slane %v270, 2
        %v272 = vadd.f32 %v270, %v271
        %v273 = vrot.slane %v272, 1
        %v274 = vadd.f32 %v272, %v273
        %v275 = vsel %vm213, %v253, 0.0
        %v276 = vrot.slane %v275, 4
        %v277 = vadd.f32 %v275, %v276
        %v278 = vrot.slane %v277, 2
        %v279 = vadd.f32 %v277, %v278
        %v280 = vrot.slane %v279, 1
        %v281 = vadd.f32 %v279, %v280
        %v282 = vmul.f32 %v260, 0.25
        %v283 = vmul.f32 %v267, 0.25
        %v284 = vmul.f32 %v274, 0.25
        %v285 = vmul.f32 %v281, 0.25
        %v286 = vadd.f32 %v282, 1e-05
        %v287 = vadd.f32 %v283, 1e-05
        %v288 = vadd.f32 %v284, 1e-05
        %v289 = vadd.f32 %v285, 1e-05
        %v290 = vrsqrt.pop %v286
        %v291 = vrsqrt.pop %v287
        %v292 = vrsqrt.pop %v288
        %v293 = vrsqrt.pop %v289
        %v294 = vld [vmem:[%s1] sm:$0xf]
        %v295 = vld [vmem:[%s2] sm:$0xf]
        %v296 = vmul.f32 %v246, %v290
        %v297 = vmul.f32 %v247, %v291
        %v298 = vmul.f32 %v248, %v292
        %v299 = vmul.f32 %v249, %v293
        %301 = vset.pattern.permute.xlu0 0
        %302 = vperm.xlu0 %301, %v294
        %v303 = vpop.permute.xlu0 %302
        %v305 = vmul.f32 %v296, %v303
        %v306 = vmul.f32 %v297, %v303
        %v307 = vmul.f32 %v298, %v303
        %v308 = vmul.f32 %v299, %v303
        %310 = vset.pattern.permute.xlu0 0
        %311 = vperm.xlu0 %310, %v295
        %v312 = vpop.permute.xlu0 %311
        %v314 = vadd.f32 %v305, %v312
        %v315 = vadd.f32 %v306, %v312
        %v316 = vadd.f32 %v307, %v312
        %v317 = vadd.f32 %v308, %v312
        %318 = vst [vmem:[%s206] sm:$0xf] %v314
        %319 = vst [vmem:[%s206 + $0x4] sm:$0xf] %v315
        %320 = vst [vmem:[%s206 + $0x8] sm:$0xf] %v316
        %321 = vst [vmem:[%s206 + $0xc] sm:$0xf] %v317
        %s322 = sand.u32 %s112, 1
        %s323 = scalar_lea.sflag [#allocation4], %s322
        %s324 = sand.u32 %s112, 1
        %s325 = smul.addr %s324, 16
        %s326 = scalar_lea.vmem [#allocation5], %s325
        // Predicated region
        $region37: #{tpu_custom_call.1} parent=31 // pred_check
          %p327 = pneg %p122
        $region38: #{tpu_custom_call.1} parent=31 // pred_check_branch
          %329 = sbr.rel (%p327) target = $region40
        $region39: #{tpu_custom_call.1} parent=31 // pred_region
          %s330 = smul.u32 4, %s24
          %s332 = ssub.s32 256, 256
          %333 = vsyncadd %s323, %s332
          %s334 = smul.addr %s330, 2
          %s335 = sadd.s32 %s25, %s334
          %s336 = smul.addr %s335, 64
          %s337 = scalar_lea.hbm %s3, %s336
          %s338 = sshll.u32 %s326, 4
          %s339 = int_to_ptr.vmem [resolvable:$true] %s338
          %344 = dma.vmem_to_hbm [thread:$0]  %s339, 256, %s337, %s323, 64, 128, 4
        $region40: #{tpu_custom_call.1} parent=31 // pred_fallthru
          _
      $region32: #{tpu_custom_call.1} parent=5 // pred_fallthru
        _
      %p345 = scmp.le.s32.totalorder 2, %s15
      // Predicated region
      $region41: #{tpu_custom_call.1} parent=5 // pred_check
        %p346 = pneg %p345
      $region42: #{tpu_custom_call.1} parent=5 // pred_check_branch
        %348 = sbr.rel (%p346) target = $region44
      $region43: #{tpu_custom_call.1} parent=5 // pred_region
        %s349 = ssub.s32 %s15, 2
        // Predicated region
        $region45: #{tpu_custom_call.1} parent=43 // pred_check
          %p350 = pneg %p128
        $region46: #{tpu_custom_call.1} parent=43 // pred_check_branch
          %352 = sbr.rel (%p350) target = $region48
        $region47: #{tpu_custom_call.1} parent=43 // pred_region
          %s353 = sand.u32 %s113, 1
          %s354 = scalar_lea.sflag [#allocation4], %s353
          %s355 = sand.u32 %s113, 1
          %s356 = smul.addr %s355, 16
          %s357 = scalar_lea.vmem [#allocation5], %s356
          %358 = dma.done %s354, 256
        $region48: #{tpu_custom_call.1} parent=43 // pred_fallthru
          _
      $region44: #{tpu_custom_call.1} parent=5 // pred_fallthru
        _
    $region6: #{tpu_custom_call.1} parent=1 // loop_footer
      %s19 = sadd.s32 1, %s15
    $region7: #{tpu_custom_call.1} parent=1 // loop_footer_branch
      %14 = sbr.rel target = $region3
    $region8: #{tpu_custom_call.1} parent=1 // loop_exit
      _
    %359 = vsyncpa [#allocation3], 1
    %s360 = scalar_lea.sflag [#allocation3], 1
    %361 = vsyncpa %s360, 1
    %362 = vsyncpa [#allocation4], 1
    %s363 = scalar_lea.sflag [#allocation4], 1
    %364 = vsyncpa %s363, 1

</llo_original>
